<compile_context>
chip_gen: v6e
topology: v6e:2x2x1
jax: 0.10.0
libtpu: 0.0.40
codegen_flags: <defaults>
</compile_context>

<pallas_src>
import jax
import jax.numpy as jnp
from jax.experimental import pallas as pl
from jax.experimental.pallas import tpu as pltpu  # noqa: F401  (kept for TPU backend)

# ---- model hyper-parameters (small, consistent with the module's config) ----
B = 2          # batch
SEQ_LEN = 16   # configs.seq_len
N_VAR = 4      # number of variates (last dim of x_enc)
D_MODEL = 32   # configs.d_model
PRED_LEN = 8   # configs.pred_len
USE_NORM = True
EPS = 1e-5


def coin_kernel(x_ref, wc_ref, bc_ref, o_ref):
    # x_ref:  [B, SEQ_LEN, N_VAR]   (native layout, no wrapper transpose)
    # wc_ref: [PRED_LEN, SEQ_LEN]   folded weight  W_proj @ W_embed
    # bc_ref: [PRED_LEN, 1]         folded bias    W_proj @ b_embed + b_proj
    # o_ref:  [B, PRED_LEN, N_VAR]  (module's output layout, written directly)
    wc = wc_ref[...]
    bc = bc_ref[...]

    # Static unroll over the tiny batch: each step is one [P,S]@[S,N] matmul.
    for b in range(B):
        x = x_ref[b].astype(jnp.float32)                       # [S, N]
        if USE_NORM:
            # Stats over the time axis (dim 1 in torch == axis 0 here),
            # matching mean(dim=1) / var(dim=1, unbiased=False).
            mean = jnp.mean(x, axis=0, keepdims=True)          # [1, N]
            xc = x - mean
            var = jnp.mean(xc * xc, axis=0, keepdims=True)     # population var
            stdev = jnp.sqrt(var + EPS)                        # [1, N]
            # Normalize/de-normalize cancels through the linear fold:
            #   ((xc/stdev)@Wc^T + bc)*stdev + mean == Wc@xc + bc*stdev + mean
            core = jnp.dot(wc, xc, preferred_element_type=jnp.float32)  # [P, N]
            pred = core + bc * stdev + mean                    # [P, N]
        else:
            pred = jnp.dot(wc, x, preferred_element_type=jnp.float32) + bc
        o_ref[b] = pred.astype(o_ref.dtype)


def coin_forward(x_enc, w_embed, b_embed, w_proj, b_proj):
    """x_enc: [B, S, N] -> pred: [B, P, N]."""
    # TODO(synk): Encoder / EncoderLayer definitions are not included in the
    # provided CoIn.py snippet, so the encoder is an identity pass-through;
    # that is what makes the following weight fold valid.
    wc = (w_proj @ w_embed).astype(jnp.float32)                       # [P, S]
    bc = (w_proj @ b_embed + b_proj).reshape(PRED_LEN, 1)             # [P, 1]
    bc = bc.astype(jnp.float32)

    itemsize = 4  # float32
    cost = pl.CostEstimate(
        flops=2 * B * PRED_LEN * SEQ_LEN * N_VAR,
        transcendentals=0,
        bytes_accessed=itemsize * (x_enc.size + wc.size + bc.size
                                   + B * PRED_LEN * N_VAR),
    )

    return pl.pallas_call(
        coin_kernel,
        out_shape=jax.ShapeDtypeStruct((B, PRED_LEN, N_VAR), jnp.float32),
        cost_estimate=cost,
    )(x_enc.astype(jnp.float32), wc, bc)


def coin_reference(x_enc, w_embed, b_embed, w_proj, b_proj):
    """Pure-JAX reference mirroring the PyTorch forward (un-folded math)."""
    x = x_enc
    if USE_NORM:
        means = jnp.mean(x, axis=1, keepdims=True)
        x = x - means
        stdev = jnp.sqrt(jnp.var(x, axis=1, keepdims=True, ddof=0) + EPS)
        x = x / stdev
    x_embed = jnp.einsum("bsn,ds->bnd", x, w_embed) + b_embed      # [B, N, D]
    enc_out = x_embed                                              # encoder = identity
    pred = jnp.einsum("bnd,pd->bnp", enc_out, w_proj) + b_proj     # [B, N, P]
    pred = jnp.transpose(pred, (0, 2, 1))                          # [B, P, N]
    if USE_NORM:
        pred = pred * stdev[:, 0:1, :] + means[:, 0:1, :]
    return pred


if __name__ == "__main__":
    key = jax.random.PRNGKey(0)
    kx, kw1, kb1, kw2, kb2 = jax.random.split(key, 5)

    x_enc = jax.random.normal(kx, (B, SEQ_LEN, N_VAR), dtype=jnp.float32)

    # Deterministic parameter init (nn.Linear-style scaling).
    s1 = 1.0 / jnp.sqrt(jnp.float32(SEQ_LEN))
    s2 = 1.0 / jnp.sqrt(jnp.float32(D_MODEL))
    w_embed = jax.random.uniform(kw1, (D_MODEL, SEQ_LEN), jnp.float32, -s1, s1)
    b_embed = jax.random.uniform(kb1, (D_MODEL,), jnp.float32, -s1, s1)
    w_proj = jax.random.uniform(kw2, (PRED_LEN, D_MODEL), jnp.float32, -s2, s2)
    b_proj = jax.random.uniform(kb2, (PRED_LEN,), jnp.float32, -s2, s2)

    out = coin_forward(x_enc, w_embed, b_embed, w_proj, b_proj)
    out = jax.block_until_ready(out)

    ref = coin_reference(x_enc, w_embed, b_embed, w_proj, b_proj)
    assert out.shape == (B, PRED_LEN, N_VAR)
    assert jnp.allclose(out, ref, atol=1e-4, rtol=1e-4), "mismatch vs JAX reference"

    print("KERNEL_OK")
</pallas_src>

<mosaic_0001>
module attributes {stable_mosaic.version = 11 : i64} {
  func.func @coin_kernel(%arg0: memref<2x16x4xf32, #tpu.memory_space<vmem>>, %arg1: memref<8x16xf32, #tpu.memory_space<vmem>>, %arg2: memref<8x1xf32, #tpu.memory_space<vmem>>, %arg3: memref<2x8x4xf32, #tpu.memory_space<vmem>>) attributes {dimension_semantics = [], scalar_prefetch = 0 : i64, scratch_operands = 0 : i64, tpu.core_type = #tpu.core_type<tc>} {
    %c0 = arith.constant 0 : index
    %c0_0 = arith.constant 0 : index
    %0 = vector.load %arg1[%c0, %c0_0] : memref<8x16xf32, #tpu.memory_space<vmem>>, vector<8x16xf32>
    %c0_1 = arith.constant 0 : index
    %c0_2 = arith.constant 0 : index
    %1 = vector.load %arg2[%c0_1, %c0_2] : memref<8x1xf32, #tpu.memory_space<vmem>>, vector<8x1xf32>
    %c0_3 = arith.constant 0 : index
    %c0_4 = arith.constant 0 : index
    %c0_5 = arith.constant 0 : index
    %2 = vector.load %arg0[%c0_3, %c0_4, %c0_5] : memref<2x16x4xf32, #tpu.memory_space<vmem>>, vector<1x16x4xf32>
    %3 = vector.shape_cast %2 : vector<1x16x4xf32> to vector<16x4xf32>
    %cst = arith.constant dense<0.000000e+00> : vector<4xf32>
    %4 = vector.multi_reduction <add>, %3, %cst [0] : vector<16x4xf32> to vector<4xf32>
    %5 = vector.shape_cast %4 : vector<4xf32> to vector<1x4xf32>
    %cst_6 = arith.constant 1.600000e+01 : f32
    %6 = vector.broadcast %cst_6 : f32 to vector<1x4xf32>
    %7 = arith.divf %5, %6 : vector<1x4xf32>
    %8 = vector.broadcast %7 : vector<1x4xf32> to vector<16x4xf32>
    %9 = arith.subf %3, %8 : vector<16x4xf32>
    %10 = arith.mulf %9, %9 : vector<16x4xf32>
    %cst_7 = arith.constant dense<0.000000e+00> : vector<4xf32>
    %11 = vector.multi_reduction <add>, %10, %cst_7 [0] : vector<16x4xf32> to vector<4xf32>
    %12 = vector.shape_cast %11 : vector<4xf32> to vector<1x4xf32>
    %cst_8 = arith.constant 1.600000e+01 : f32
    %13 = vector.broadcast %cst_8 : f32 to vector<1x4xf32>
    %14 = arith.divf %12, %13 : vector<1x4xf32>
    %cst_9 = arith.constant 9.99999974E-6 : f32
    %15 = vector.broadcast %cst_9 : f32 to vector<1x4xf32>
    %16 = arith.addf %14, %15 : vector<1x4xf32>
    %17 = math.sqrt %16 : vector<1x4xf32>
    %cst_10 = arith.constant dense<0.000000e+00> : vector<8x4xf32>
    %18 = tpu.matmul %0, %9, %cst_10 {dimension_numbers = #tpu.dot_dimension_numbers<[1], [0], [0], [1], [0, 0, 1, 1], [], []>} : vector<8x16xf32>, vector<16x4xf32>, vector<8x4xf32> -> vector<8x4xf32>
    %19 = vector.broadcast %1 : vector<8x1xf32> to vector<8x4xf32>
    %20 = vector.broadcast %17 : vector<1x4xf32> to vector<8x4xf32>
    %21 = arith.mulf %19, %20 : vector<8x4xf32>
    %22 = arith.addf %18, %21 : vector<8x4xf32>
    %23 = vector.broadcast %7 : vector<1x4xf32> to vector<8x4xf32>
    %24 = arith.addf %22, %23 : vector<8x4xf32>
    %c0_11 = arith.constant 0 : index
    %c0_12 = arith.constant 0 : index
    %c0_13 = arith.constant 0 : index
    %25 = vector.load %arg3[%c0_11, %c0_12, %c0_13] : memref<2x8x4xf32, #tpu.memory_space<vmem>>, vector<1x8x4xf32>
    %26 = vector.shape_cast %25 : vector<1x8x4xf32> to vector<8x4xf32>
    %27 = vector.shape_cast %24 : vector<8x4xf32> to vector<1x8x4xf32>
    tpu.vector_store %arg3[%c0_11, %c0_12, %c0_13], %27 {strides = array<i32>} : memref<2x8x4xf32, #tpu.memory_space<vmem>>, vector<1x8x4xf32>,
    %c1 = arith.constant 1 : index
    %c0_14 = arith.constant 0 : index
    %c0_15 = arith.constant 0 : index
    %28 = vector.load %arg0[%c1, %c0_14, %c0_15] : memref<2x16x4xf32, #tpu.memory_space<vmem>>, vector<1x16x4xf32>
    %29 = vector.shape_cast %28 : vector<1x16x4xf32> to vector<16x4xf32>
    %cst_16 = arith.constant dense<0.000000e+00> : vector<4xf32>
    %30 = vector.multi_reduction <add>, %29, %cst_16 [0] : vector<16x4xf32> to vector<4xf32>
    %31 = vector.shape_cast %30 : vector<4xf32> to vector<1x4xf32>
    %cst_17 = arith.constant 1.600000e+01 : f32
    %32 = vector.broadcast %cst_17 : f32 to vector<1x4xf32>
    %33 = arith.divf %31, %32 : vector<1x4xf32>
    %34 = vector.broadcast %33 : vector<1x4xf32> to vector<16x4xf32>
    %35 = arith.subf %29, %34 : vector<16x4xf32>
    %36 = arith.mulf %35, %35 : vector<16x4xf32>
    %cst_18 = arith.constant dense<0.000000e+00> : vector<4xf32>
    %37 = vector.multi_reduction <add>, %36, %cst_18 [0] : vector<16x4xf32> to vector<4xf32>
    %38 = vector.shape_cast %37 : vector<4xf32> to vector<1x4xf32>
    %cst_19 = arith.constant 1.600000e+01 : f32
    %39 = vector.broadcast %cst_19 : f32 to vector<1x4xf32>
    %40 = arith.divf %38, %39 : vector<1x4xf32>
    %cst_20 = arith.constant 9.99999974E-6 : f32
    %41 = vector.broadcast %cst_20 : f32 to vector<1x4xf32>
    %42 = arith.addf %40, %41 : vector<1x4xf32>
    %43 = math.sqrt %42 : vector<1x4xf32>
    %cst_21 = arith.constant dense<0.000000e+00> : vector<8x4xf32>
    %44 = tpu.matmul %0, %35, %cst_21 {dimension_numbers = #tpu.dot_dimension_numbers<[1], [0], [0], [1], [0, 0, 1, 1], [], []>} : vector<8x16xf32>, vector<16x4xf32>, vector<8x4xf32> -> vector<8x4xf32>
    %45 = vector.broadcast %1 : vector<8x1xf32> to vector<8x4xf32>
    %46 = vector.broadcast %43 : vector<1x4xf32> to vector<8x4xf32>
    %47 = arith.mulf %45, %46 : vector<8x4xf32>
    %48 = arith.addf %44, %47 : vector<8x4xf32>
    %49 = vector.broadcast %33 : vector<1x4xf32> to vector<8x4xf32>
    %50 = arith.addf %48, %49 : vector<8x4xf32>
    %c1_22 = arith.constant 1 : index
    %c0_23 = arith.constant 0 : index
    %c0_24 = arith.constant 0 : index
    %51 = vector.load %arg3[%c1_22, %c0_23, %c0_24] : memref<2x8x4xf32, #tpu.memory_space<vmem>>, vector<1x8x4xf32>
    %52 = vector.shape_cast %51 : vector<1x8x4xf32> to vector<8x4xf32>
    %53 = vector.shape_cast %50 : vector<8x4xf32> to vector<1x8x4xf32>
    tpu.vector_store %arg3[%c1_22, %c0_23, %c0_24], %53 {strides = array<i32>} : memref<2x8x4xf32, #tpu.memory_space<vmem>>, vector<1x8x4xf32>,
    return
  }
}

</mosaic_0001>

<llo_original>
// kernel: tpu_custom_call.1
$region0: #{tpu_custom_call.1}
  #allocation0 [shape = 'u32[]', space=smem, size = 0x4, offset = 0x4, fixed_abs, tag = 'smem constant byte address 0x4 - core index']
  #allocation1 [shape = 'u32[144,128]{1,0:T(1,128)}', space=vmem, size = 0x12000, scoped, tag = 'internal scratch']
  %s0 = inlined_call_operand.vmem [shape: f32[2,16,4], index: 0, kind: input, shape index: {}]
  %s1 = inlined_call_operand.vmem [shape: f32[8,16], index: 1, kind: input, shape index: {}]
  %s2 = inlined_call_operand.vmem [shape: f32[8,1], index: 2, kind: input, shape index: {}]
  %s3 = inlined_call_operand.vmem [shape: f32[2,8,4], index: 3, kind: output, shape index: {}]
  %s4 = sld [smem:[#allocation0]]
  $region22: #{tpu_custom_call.1} parent=0
    _
  %s6 = ssub.s32 1, %s4
  %s7 = scalar_select 0, %s6, %s4
  // Predicated region
  $region2: #{tpu_custom_call.1} parent=0 // pred_check
    _
  $region3: #{tpu_custom_call.1} parent=0 // pred_check_branch
    %9 = sbr.rel (0) target = $region5
  $region4: #{tpu_custom_call.1} parent=0 // pred_region
    _
  $region5: #{tpu_custom_call.1} parent=0 // pred_fallthru
    _
  // Predicated region
  $region6: #{tpu_custom_call.1} parent=0 // pred_check
    _
  $region7: #{tpu_custom_call.1} parent=0 // pred_check_branch
    %11 = sbr.rel (0) target = $region9
  $region8: #{tpu_custom_call.1} parent=0 // pred_region
    _
  $region9: #{tpu_custom_call.1} parent=0 // pred_fallthru
    _
  // Predicated region
  $region10: #{tpu_custom_call.1} parent=0 // pred_check
    _
  $region11: #{tpu_custom_call.1} parent=0 // pred_check_branch
    %13 = sbr.rel (0) target = $region13
  $region12: #{tpu_custom_call.1} parent=0 // pred_region
    _
  $region13: #{tpu_custom_call.1} parent=0 // pred_fallthru
    _
  %v14 = vld [vmem:[%s1] sm:$0xff]
  %v15 = vld [vmem:[%s2] sm:$0xff]
  %v16 = vld [vmem:[%s0] sm:$0xff]
  %v17 = vld [vmem:[%s0 + $0x8] sm:$0xff]
  %vm18 = vcmask 31744
  %v19 = vsel %vm18, %v16, 0.0
  %v20 = vsel %vm18, %v17, 0.0
  %v21 = vadd.f32 %v19, %v20
  %v22 = vrot.slane %v21, 4
  %v23 = vadd.f32 %v21, %v22
  %v24 = vrot.slane %v23, 2
  %v25 = vadd.f32 %v23, %v24
  %v26 = vrot.slane %v25, 1
  %v27 = vadd.f32 %v25, %v26
  %v28 = vrcp.pop 16.0
  %v29 = vmul.f32 %v27, %v28
  %v30 = vsub.f32 %v16, %v29
  %v31 = vsub.f32 %v17, %v29
  %v32 = vmul.f32 %v30, %v30
  %v33 = vmul.f32 %v31, %v31
  %v34 = vsel %vm18, %v32, 0.0
  %v35 = vsel %vm18, %v33, 0.0
  %v36 = vadd.f32 %v34, %v35
  %v37 = vrot.slane %v36, 4
  %v38 = vadd.f32 %v36, %v37
  %v39 = vrot.slane %v38, 2
  %v40 = vadd.f32 %v38, %v39
  %v41 = vrot.slane %v40, 1
  %v42 = vadd.f32 %v40, %v41
  %v43 = vmul.f32 %v42, %v28
  %v44 = vadd.f32 %v43, 1e-05
  %v45 = vrsqrt.pop %v44
  %v46 = vmul.f32 %v44, %v45
  %vm47 = vcmp.eq.f32.partialorder %v44, inf
  %v48 = vsel %vm47, %v44, %v46
  %vm49 = vcmp.eq.f32.partialorder %v44, 0.0
  %v50 = vand.u32 %v44, 2147483648
  %v51 = vsel %vm49, %v50, %v48
  %53 = vset.pattern.permute.xlu0 0
  %54 = vperm.xlu0 %53, %v15
  %v55 = vpop.permute.xlu0 %54
  %v57 = vmul.f32 %v55, %v51
  %vm58 = vcmask 130048
  %v60 = vsel %vm58, %v14, 0
  %62 = vmatprep.subr.mxu0 0.0
  %63 = vmatpush1.msra.mxu0 0.0
  %64 = vmatprep.subr.mxu0 0.0
  %65 = vmatpush1.msra.mxu0 0.0
  %66 = vmatprep.subr.mxu0 0.0
  %67 = vmatpush1.msra.mxu0 0.0
  %68 = vmatprep.subr.mxu0 0.0
  %69 = vmatpush1.msra.mxu0 0.0
  %70 = vmatprep.subr.mxu0 0.0
  %71 = vmatpush1.msra.mxu0 0.0
  %72 = vmatprep.subr.mxu0 0.0
  %73 = vmatpush1.msra.mxu0 0.0
  %74 = vmatprep.subr.mxu0 0.0
  %75 = vmatpush1.msra.mxu0 0.0
  %76 = vmatprep.subr.mxu0 0.0
  %77 = vmatpush1.msra.mxu0 0.0
  %78 = vmatprep.subr.mxu0 0.0
  %79 = vmatpush1.msra.mxu0 0.0
  %80 = vmatprep.subr.mxu0 0.0
  %81 = vmatpush1.msra.mxu0 0.0
  %82 = vmatprep.subr.mxu0 0.0
  %83 = vmatpush1.msra.mxu0 0.0
  %84 = vmatprep.subr.mxu0 0.0
  %85 = vmatpush1.msra.mxu0 0.0
  %86 = vmatprep.subr.mxu0 0.0
  %87 = vmatpush1.msra.mxu0 0.0
  %88 = vmatprep.subr.mxu0 0.0
  %89 = vmatpush1.msra.mxu0 0.0
  %90 = vmatprep.subr.mxu0 0.0
  %91 = vmatpush1.msra.mxu0 %v31
  %92 = vmatprep.subr.mxu0 0.0
  %93 = vmatpush1.msra.mxu0 %v30
  %94 = vmatprep.subr.mxu0 0.0
  %95 = vmatpush2.msra.mxu0 0.0
  %96 = vmatprep.subr.mxu0 0.0
  %97 = vmatpush2.msra.mxu0 0.0
  %98 = vmatprep.subr.mxu0 0.0
  %99 = vmatpush2.msra.mxu0 0.0
  %100 = vmatprep.subr.mxu0 0.0
  %101 = vmatpush2.msra.mxu0 0.0
  %102 = vmatprep.subr.mxu0 0.0
  %103 = vmatpush2.msra.mxu0 0.0
  %104 = vmatprep.subr.mxu0 0.0
  %105 = vmatpush2.msra.mxu0 0.0
  %106 = vmatprep.subr.mxu0 0.0
  %107 = vmatpush2.msra.mxu0 0.0
  %108 = vmatprep.subr.mxu0 0.0
  %109 = vmatpush2.msra.mxu0 0.0
  %110 = vmatprep.subr.mxu0 0.0
  %111 = vmatpush2.msra.mxu0 0.0
  %112 = vmatprep.subr.mxu0 0.0
  %113 = vmatpush2.msra.mxu0 0.0
  %114 = vmatprep.subr.mxu0 0.0
  %115 = vmatpush2.msra.mxu0 0.0
  %116 = vmatprep.subr.mxu0 0.0
  %117 = vmatpush2.msra.mxu0 0.0
  %118 = vmatprep.subr.mxu0 0.0
  %119 = vmatpush2.msra.mxu0 0.0
  %120 = vmatprep.subr.mxu0 0.0
  %121 = vmatpush2.msra.mxu0 0.0
  %122 = vmatprep.subr.mxu0 0.0
  %123 = vmatpush2.msra.mxu0 0.0
  %124 = vmatprep.subr.mxu0 0.0
  %125 = vmatpush2.msra.mxu0 0.0
  %126 = vmatprep.mubr.f32.mxu0 0.0
  %127 = vmatmul.mubr.f32.gmra.mxu0 %v60
  %v128 = vpop.f32.mrf.mxu0
  %v129 = vadd.f32 %v57, %v128
  %v130 = vpop.f32.mrf.mxu0
  %131 = vdwg.mxu0
  %v132 = vadd.f32 %v129, %v29
  %133 = vst.msk [vmem:[%s3] sm:$0xff] %vm18, %v132
  %s134 = scalar_lea.vmem %s0, 16
  %v135 = vld [vmem:[%s134] sm:$0xff]
  %v136 = vld [vmem:[%s134 + $0x8] sm:$0xff]
  %v137 = vsel %vm18, %v135, 0.0
  %v138 = vsel %vm18, %v136, 0.0
  %v139 = vadd.f32 %v137, %v138
  %v140 = vrot.slane %v139, 4
  %v141 = vadd.f32 %v139, %v140
  %v142 = vrot.slane %v141, 2
  %v143 = vadd.f32 %v141, %v142
  %v144 = vrot.slane %v143, 1
  %v145 = vadd.f32 %v143, %v144
  %v146 = vmul.f32 %v145, %v28
  %v147 = vsub.f32 %v135, %v146
  %v148 = vsub.f32 %v136, %v146
  %v149 = vmul.f32 %v147, %v147
  %v150 = vmul.f32 %v148, %v148
  %v151 = vsel %vm18, %v149, 0.0
  %v152 = vsel %vm18, %v150, 0.0
  %v153 = vadd.f32 %v151, %v152
  %v154 = vrot.slane %v153, 4
  %v155 = vadd.f32 %v153, %v154
  %v156 = vrot.slane %v155, 2
  %v157 = vadd.f32 %v155, %v156
  %v158 = vrot.slane %v157, 1
  %v159 = vadd.f32 %v157, %v158
  %v160 = vmul.f32 %v159, %v28
  %v161 = vadd.f32 %v160, 1e-05
  %v162 = vrsqrt.pop %v161
  %v163 = vmul.f32 %v161, %v162
  %vm164 = vcmp.eq.f32.partialorder %v161, inf
  %v165 = vsel %vm164, %v161, %v163
  %vm166 = vcmp.eq.f32.partialorder %v161, 0.0
  %v167 = vand.u32 %v161, 2147483648
  %v168 = vsel %vm166, %v167, %v165
  %v169 = vmul.f32 %v55, %v168
  %170 = vmatprep.subr.mxu0 0.0
  %171 = vmatpush1.msra.mxu0 0.0
  %172 = vmatprep.subr.mxu0 0.0
  %173 = vmatpush1.msra.mxu0 0.0
  %174 = vmatprep.subr.mxu0 0.0
  %175 = vmatpush1.msra.mxu0 0.0
  %176 = vmatprep.subr.mxu0 0.0
  %177 = vmatpush1.msra.mxu0 0.0
  %178 = vmatprep.subr.mxu0 0.0
  %179 = vmatpush1.msra.mxu0 0.0
  %180 = vmatprep.subr.mxu0 0.0
  %181 = vmatpush1.msra.mxu0 0.0
  %182 = vmatprep.subr.mxu0 0.0
  %183 = vmatpush1.msra.mxu0 0.0
  %184 = vmatprep.subr.mxu0 0.0
  %185 = vmatpush1.msra.mxu0 0.0
  %186 = vmatprep.subr.mxu0 0.0
  %187 = vmatpush1.msra.mxu0 0.0
  %188 = vmatprep.subr.mxu0 0.0
  %189 = vmatpush1.msra.mxu0 0.0
  %190 = vmatprep.subr.mxu0 0.0
  %191 = vmatpush1.msra.mxu0 0.0
  %192 = vmatprep.subr.mxu0 0.0
  %193 = vmatpush1.msra.mxu0 0.0
  %194 = vmatprep.subr.mxu0 0.0
  %195 = vmatpush1.msra.mxu0 0.0
  %196 = vmatprep.subr.mxu0 0.0
  %197 = vmatpush1.msra.mxu0 0.0
  %198 = vmatprep.subr.mxu0 0.0
  %199 = vmatpush1.msra.mxu0 %v148
  %200 = vmatprep.subr.mxu0 0.0
  %201 = vmatpush1.msra.mxu0 %v147
  %202 = vmatprep.subr.mxu0 0.0
  %203 = vmatpush2.msra.mxu0 0.0
  %204 = vmatprep.subr.mxu0 0.0
  %205 = vmatpush2.msra.mxu0 0.0
  %206 = vmatprep.subr.mxu0 0.0
  %207 = vmatpush2.msra.mxu0 0.0
  %208 = vmatprep.subr.mxu0 0.0
  %209 = vmatpush2.msra.mxu0 0.0
  %210 = vmatprep.subr.mxu0 0.0
  %211 = vmatpush2.msra.mxu0 0.0
  %212 = vmatprep.subr.mxu0 0.0
  %213 = vmatpush2.msra.mxu0 0.0
  %214 = vmatprep.subr.mxu0 0.0
  %215 = vmatpush2.msra.mxu0 0.0
  %216 = vmatprep.subr.mxu0 0.0
  %217 = vmatpush2.msra.mxu0 0.0
  %218 = vmatprep.subr.mxu0 0.0
  %219 = vmatpush2.msra.mxu0 0.0
  %220 = vmatprep.subr.mxu0 0.0
  %221 = vmatpush2.msra.mxu0 0.0
  %222 = vmatprep.subr.mxu0 0.0
  %223 = vmatpush2.msra.mxu0 0.0
  %224 = vmatprep.subr.mxu0 0.0
  %225 = vmatpush2.msra.mxu0 0.0
  %226 = vmatprep.subr.mxu0 0.0
  %227 = vmatpush2.msra.mxu0 0.0
  %228 = vmatprep.subr.mxu0 0.0
  %229 = vmatpush2.msra.mxu0 0.0
  %230 = vmatprep.subr.mxu0 0.0
  %231 = vmatpush2.msra.mxu0 0.0
  %232 = vmatprep.subr.mxu0 0.0
  %233 = vmatpush2.msra.mxu0 0.0
  %234 = vmatprep.mubr.f32.mxu0 0.0
  %235 = vmatmul.mubr.f32.gmra.mxu0 %v60
  %v236 = vpop.f32.mrf.mxu0
  %v237 = vadd.f32 %v169, %v236
  %v238 = vpop.f32.mrf.mxu0
  %239 = vdwg.mxu0
  %v240 = vadd.f32 %v237, %v146
  %s241 = scalar_lea.vmem %s3, 8
  %242 = vst.msk [vmem:[%s241] sm:$0xff] %vm18, %v240
  // Predicated region
  $region14: #{tpu_custom_call.1} parent=0 // pred_check
    _
  $region15: #{tpu_custom_call.1} parent=0 // pred_check_branch
    %244 = sbr.rel (0) target = $region17
  $region16: #{tpu_custom_call.1} parent=0 // pred_region
    _
  $region17: #{tpu_custom_call.1} parent=0 // pred_fallthru
    _
  // Predicated region
  $region18: #{tpu_custom_call.1} parent=0 // pred_check
    _
  $region19: #{tpu_custom_call.1} parent=0 // pred_check_branch
    %246 = sbr.rel (0) target = $region21
  $region20: #{tpu_custom_call.1} parent=0 // pred_region
    _
  $region21: #{tpu_custom_call.1} parent=0 // pred_fallthru
    _

</llo_original>
